<compile_context>
chip_gen: v7x
topology: tpu7x:2x2x1
jax: 0.10.0
libtpu: 0.0.40
codegen_flags: <defaults>
</compile_context>

<pallas_src>
import functools

import jax
import jax.numpy as jnp
from jax.experimental import pallas as pl
from jax.experimental.pallas import tpu as pltpu

LANES = 128


def _leaky_relu_kernel(x_ref, o_ref, *, leak, use_max):
    # x_ref / o_ref: (block_rows, cols) VMEM tiles; pure VPU elementwise.
    x = x_ref[...]
    if use_max:
        # maximum(x, leak*x) == where(x > 0, x, leak*x) for 0 < leak <= 1.
        o_ref[...] = jnp.maximum(x, x * leak)
    else:
        o_ref[...] = jnp.where(x > 0, x, x * leak)


def _default_tile_bytes():
    # Per-generation tile sizing against scoped-VMEM defaults.
    # Double-buffered in+out footprint ~= 4 x tile:
    #   v5e (16 MiB scoped):            2 MiB tiles ->  8 MiB
    #   v6e (32 MiB scoped):            4 MiB tiles -> 16 MiB
    #   v7x (32 MiB scoped, 64 phys):   4 MiB tiles -> 16 MiB
    try:
        kind = jax.devices()[0].device_kind.lower()
    except Exception:
        return 2 * 1024 * 1024
    if "v5 lite" in kind or "v5lite" in kind or "v5e" in kind:
        return 2 * 1024 * 1024
    return 4 * 1024 * 1024


def my_activation_function(x, leak=0.01, *, target_tile_bytes=None,
                           donate_input=False):
    """Elementwise leaky-ReLU. x: any shape (NCHW expected), any float dtype."""
    orig_shape = x.shape
    orig_dtype = x.dtype
    n_elem = x.size
    if n_elem == 0:
        return x

    if target_tile_bytes is None:
        target_tile_bytes = _default_tile_bytes()

    itemsize = jnp.dtype(orig_dtype).itemsize
    # Sublane packing: 8 rows/vreg for 32-bit, 16 for 16-bit, 32 for 8-bit.
    sublane_mult = 8 * max(1, 4 // itemsize)

    # Pick a 2-D streaming view that never copies in HBM:
    #  * lane-divisible total -> (rows, 128): full-lane unmasked stores.
    #  * otherwise -> keep the original trailing dim as the block's last dim;
    #    Pallas masks those stores (cheaper than an extra pad/slice HBM pass).
    if n_elem % LANES == 0:
        cols = LANES
    elif x.ndim >= 1:
        cols = orig_shape[-1]
    else:
        cols = n_elem
    rows = n_elem // cols
    x2d = jnp.reshape(x, (rows, cols))  # free: contiguous row-major reshape

    # block_rows: ~target_tile_bytes per tile, multiple of the sublane
    # packing, clamped so tiny inputs don't allocate huge VMEM buffers.
    max_block_rows = max(sublane_mult, target_tile_bytes // (cols * itemsize))
    max_block_rows = (max_block_rows // sublane_mult) * sublane_mult
    rows_rounded = ((rows + sublane_mult - 1) // sublane_mult) * sublane_mult
    block_rows = min(max_block_rows, rows_rounded)

    grid = (pl.cdiv(rows, block_rows),)

    use_max = isinstance(leak, (int, float)) and 0.0 < float(leak) <= 1.0
    kernel = functools.partial(_leaky_relu_kernel, leak=leak, use_max=use_max)

    out2d = pl.pallas_call(
        kernel,
        out_shape=jax.ShapeDtypeStruct((rows, cols), orig_dtype),
        grid=grid,
        in_specs=[pl.BlockSpec((block_rows, cols), lambda i: (i, 0))],
        out_specs=pl.BlockSpec((block_rows, cols), lambda i: (i, 0)),
        compiler_params=pltpu.CompilerParams(
            # Shards the 1-D grid across both TensorCores on v7x; no-op on
            # single-TC v5e/v6e.
            # TODO(synk): verify in an xprof trace that both v7x TCs stream;
            # if not, switch this axis to pltpu.CORE_PARALLEL.
            dimension_semantics=("parallel",)
        ),
        cost_estimate=pl.CostEstimate(
            flops=2 * n_elem,            # mul + max/select per element
            transcendentals=0,
            bytes_accessed=2 * n_elem * itemsize,  # one read + one write
        ),
        input_output_aliases=({0: 0} if donate_input else {}),
    )(x2d)

    return jnp.reshape(out2d, orig_shape)


if __name__ == "__main__":
    key = jax.random.PRNGKey(0)
    leak = 0.01

    # Main case: NCHW activations, lane-divisible element count.
    x = jax.random.normal(key, (2, 4, 16, 16), dtype=jnp.float32)
    y = jax.block_until_ready(my_activation_function(x, leak=leak))
    y_ref = jnp.where(x > 0, x, x * leak)
    assert y.shape == x.shape and y.dtype == x.dtype
    assert jnp.allclose(y, y_ref, atol=0.0, rtol=0.0)

    # Ragged last grid block (rows not a multiple of the sublane packing).
    x2 = jax.random.normal(jax.random.PRNGKey(1), (3, 5, 24, 32), dtype=jnp.float32)
    y2 = jax.block_until_ready(my_activation_function(x2, leak=leak))
    assert jnp.allclose(y2, jnp.where(x2 > 0, x2, x2 * leak), atol=0.0, rtol=0.0)

    # Non-lane-divisible total: exercises the no-pad masked-store path.
    x3 = jax.random.normal(jax.random.PRNGKey(2), (2, 3, 7, 5), dtype=jnp.float32)
    y3 = jax.block_until_ready(my_activation_function(x3, leak=leak))
    assert jnp.allclose(y3, jnp.where(x3 > 0, x3, x3 * leak), atol=0.0, rtol=0.0)

    print("KERNEL_OK")
</pallas_src>

<mosaic_0001>
module attributes {stable_mosaic.version = 11 : i64} {
  func.func @_leaky_relu_kernel(%arg0: i32, %arg1: memref<16x128xf32, #tpu.memory_space<vmem>>, %arg2: memref<16x128xf32, #tpu.memory_space<vmem>>) attributes {dimension_semantics = [#tpu.dimension_semantics<parallel>], iteration_bounds = array<i64: 1>, scalar_prefetch = 0 : i64, scratch_operands = 0 : i64, tpu.core_type = #tpu.core_type<tc>, window_params = [{transform_indices = @transform_0, window_bounds = array<i64: 16, 128>}, {transform_indices = @transform_1, window_bounds = array<i64: 16, 128>}]} {
    %c0 = arith.constant 0 : index
    %c0_0 = arith.constant 0 : index
    %0 = vector.load %arg1[%c0, %c0_0] : memref<16x128xf32, #tpu.memory_space<vmem>>, vector<16x128xf32>
    %cst = arith.constant 0.00999999977 : f32
    %1 = vector.broadcast %cst : f32 to vector<16x128xf32>
    %2 = arith.mulf %0, %1 : vector<16x128xf32>
    %3 = arith.maximumf %0, %2 : vector<16x128xf32>
    %c0_1 = arith.constant 0 : index
    %c0_2 = arith.constant 0 : index
    %4 = vector.load %arg2[%c0_1, %c0_2] : memref<16x128xf32, #tpu.memory_space<vmem>>, vector<16x128xf32>
    tpu.vector_store %arg2[%c0_1, %c0_2], %3 {strides = array<i32>} : memref<16x128xf32, #tpu.memory_space<vmem>>, vector<16x128xf32>,
    return
  }
  func.func @transform_0(%arg0: i32) -> (i32, i32) {
    %c0_i32 = arith.constant 0 : i32
    %c0_i32_0 = arith.constant 0 : i32
    return %arg0, %c0_i32 : i32, i32
  }
  func.func @transform_1(%arg0: i32) -> (i32, i32) {
    %c0_i32 = arith.constant 0 : i32
    %c0_i32_0 = arith.constant 0 : i32
    return %arg0, %c0_i32 : i32, i32
  }
}

</mosaic_0001>

<llo_original>
// kernel: tpu_custom_call.1
$region0: #{tpu_custom_call.1}
  #allocation0 [shape = 'u32[]', space=smem, size = 0x4, offset = 0x4, fixed_abs, tag = 'smem constant byte address 0x4 - core index']
  #allocation1 [shape = 'u32[144,128]{1,0:T(1,128)}', space=vmem, size = 0x12000, scoped, tag = 'internal scratch']
  %s0 = inlined_call_operand.hbm [shape: f32[16,128], index: 0, kind: input, shape index: {}]
  %s1 = inlined_call_operand.hbm [shape: f32[16,128], index: 1, kind: output, shape index: {}]
  %s2 = sld [smem:[#allocation0]]
  $region18: #{tpu_custom_call.1} parent=0
    _
  %s4 = ssub.s32 1, %s2
  %s5 = scalar_select 0, %s4, %s2
  $region1: #{tpu_custom_call.1} parent=0
    #allocation2 [shape = 'u8[8192]{0}', space=vmem, size = 0x2000, scoped, tag = 'input window, operand 0, single buffered']
    #allocation3 [shape = 's32[1]{0}', space=sflag, size = 0x4, scoped, tag = 'scoped memory for tpu_custom_call.1']
    #allocation4 [shape = 's32[1]{0}', space=sflag, size = 0x4, scoped, tag = 'scoped memory for tpu_custom_call.1']
    #allocation5 [shape = 'u8[8192]{0}', space=vmem, size = 0x2000, scoped, tag = 'output window, operand 0, single buffered']
    %6 = vsyncpa [#allocation3], 0
    %7 = vsyncpa [#allocation4], 0
    // Predicated region
    $region2: #{tpu_custom_call.1} parent=1 // pred_check
      _
    $region3: #{tpu_custom_call.1} parent=1 // pred_check_branch
      %9 = sbr.rel (0) target = $region5
    $region4: #{tpu_custom_call.1} parent=1 // pred_region
      %s11 = ssub.s32 256, 256
      %12 = vsyncadd [#allocation3], %s11
      %s13 = sshll.u32 [#allocation2], 4
      %s14 = int_to_ptr.vmem [resolvable:$true] %s13
      %19 = dma.hbm_to_vmem [thread:$0]  %s0, 256, %s14, [#allocation3], 128, 128, 8
    $region5: #{tpu_custom_call.1} parent=1 // pred_fallthru
      _
    // Predicated region
    $region6: #{tpu_custom_call.1} parent=1 // pred_check
      _
    $region7: #{tpu_custom_call.1} parent=1 // pred_check_branch
      %21 = sbr.rel (0) target = $region9
    $region8: #{tpu_custom_call.1} parent=1 // pred_region
      %22 = dma.done [#allocation3], 256
    $region9: #{tpu_custom_call.1} parent=1 // pred_fallthru
      _
    %v23 = vld [vmem:[#allocation2] sm:$0xff]
    %v24 = vld [vmem:[#allocation2 + $0x8] sm:$0xff]
    %v25 = vmul.f32 %v23, 0.01
    %v26 = vmul.f32 %v24, 0.01
    %v27 = vmax.f32 %v23, %v25
    %v28 = vmax.f32 %v24, %v26
    %29 = vst [vmem:[#allocation5] sm:$0xff] %v27
    %30 = vst [vmem:[#allocation5 + $0x8] sm:$0xff] %v28
    // Predicated region
    $region10: #{tpu_custom_call.1} parent=1 // pred_check
      _
    $region11: #{tpu_custom_call.1} parent=1 // pred_check_branch
      %32 = sbr.rel (0) target = $region13
    $region12: #{tpu_custom_call.1} parent=1 // pred_region
      %s34 = ssub.s32 256, 256
      %35 = vsyncadd [#allocation4], %s34
      %s36 = sshll.u32 [#allocation5], 4
      %s37 = int_to_ptr.vmem [resolvable:$true] %s36
      %42 = dma.vmem_to_hbm [thread:$0]  %s37, 256, %s1, [#allocation4], 128, 128, 8
    $region13: #{tpu_custom_call.1} parent=1 // pred_fallthru
      _
    // Predicated region
    $region14: #{tpu_custom_call.1} parent=1 // pred_check
      _
    $region15: #{tpu_custom_call.1} parent=1 // pred_check_branch
      %44 = sbr.rel (0) target = $region17
    $region16: #{tpu_custom_call.1} parent=1 // pred_region
      %45 = dma.done [#allocation4], 256
    $region17: #{tpu_custom_call.1} parent=1 // pred_fallthru
      _
    %46 = vsyncpa [#allocation3], 1
    %47 = vsyncpa [#allocation4], 1

</llo_original>
